<compile_context>
chip_gen: v5e
topology: v5e:2x2
jax: 0.10.0
libtpu: 0.0.40
codegen_flags: <defaults>
</compile_context>

<pallas_src>
import functools
import math

import jax
import jax.numpy as jnp
from jax import lax
from jax.experimental import pallas as pl
from jax.experimental.pallas import tpu as pltpu

_LANE = 128
_VMEM_CAP = 64 * 1024 * 1024  # safe scoped-VMEM ceiling on all generations


def _round_up(x, m):
    return ((x + m - 1) // m) * m


def _pick_tile(total, cap):
    """Largest multiple-of-128 divisor of `total` that is <= cap."""
    best = _LANE
    d = _LANE
    while d <= min(total, cap):
        if total % d == 0:
            best = d
        d += _LANE
    return best


def _vmem_limit(block_bytes):
    # double-buffered pipeline stages + headroom, capped for v7x's 64 MiB.
    return int(min(max(4 * block_bytes, 8 * 1024 * 1024), _VMEM_CAP))


# ----------------------------- stage 1: MLP ---------------------------------
def _mlp_kernel(z_ref, w_ref, b_ref, h_ref, *, num_layers):
    """grid = (relation, row_tile):  h_ref <- tanh-MLP_r(z row tile)."""
    h = z_ref[...]                                          # (tm, D) bf16
    for l in range(num_layers):                             # static unroll
        acc = jnp.dot(h.astype(jnp.bfloat16), w_ref[0, l],
                      preferred_element_type=jnp.float32)   # bf16 x bf16 -> f32
        h = jnp.tanh(acc + b_ref[0, l])                     # (tm, D) f32
    h_ref[...] = h.astype(h_ref.dtype)                      # bf16 store


# --------------------------- stage 2: H @ H.T -------------------------------
def _hht_kernel(hl_ref, hr_ref, o_ref, acc_ref):
    """grid = (i, j, k):  A[i,j] += H[i,k] . H[j,k]   (relation sum in K)."""
    @pl.when(pl.program_id(2) == 0)
    def _():
        acc_ref[...] = jnp.zeros_like(acc_ref)

    acc_ref[...] += lax.dot_general(
        hl_ref[...], hr_ref[...],
        dimension_numbers=(((1,), (1,)), ((), ())),   # contract feature dims
        preferred_element_type=jnp.float32)

    @pl.when(pl.program_id(2) == pl.num_programs(2) - 1)
    def _():
        o_ref[...] = acc_ref[...]


def maped_inner_product_decoder(z, params):
    """Fused forward of MapedInnerProductDecoder.

    z      : [N, in_size] float32 node embeddings.
    params : list (len = num_of_relations) of per-relation lists of
             (W [f_in, f_out], b [f_out]) Linear parameters of node_mlp.
    Returns: [N, N] float32  ==  sum_r  mlp_r(z) @ mlp_r(z).T
    """
    n, f_in = z.shape
    num_rel = len(params)
    num_layers = len(params[0])

    dims = [f_in] + [w.shape[1] for (w, _) in params[0]]
    d_pad = _round_up(max(dims), _LANE)     # lane-dense uniform feature dim
    n_pad = _round_up(n, _LANE)             # lane-dense row dim
    k_pad = num_rel * d_pad                 # folded contraction depth

    # Pack / zero-pad parameters: weights [R,L,D,D] bf16, biases [R,L,1,D] f32.
    w_stacked = jnp.zeros((num_rel, num_layers, d_pad, d_pad), jnp.float32)
    b_stacked = jnp.zeros((num_rel, num_layers, 1, d_pad), jnp.float32)
    for r, layer_params in enumerate(params):
        for l, (w, b) in enumerate(layer_params):
            w_stacked = w_stacked.at[r, l, : w.shape[0], : w.shape[1]].set(w)
            b_stacked = b_stacked.at[r, l, 0, : b.shape[0]].set(b)
    w_stacked = w_stacked.astype(jnp.bfloat16)

    z_pad = (jnp.zeros((n_pad, d_pad), jnp.float32)
             .at[:n, :f_in].set(z)).astype(jnp.bfloat16)

    # ------------- stage 1:  H = [ mlp_0(z) | ... | mlp_{R-1}(z) ] ----------
    tm1 = _pick_tile(n_pad, 1024)
    s1_block_bytes = (tm1 * d_pad * 2                       # z tile (bf16)
                      + num_layers * d_pad * d_pad * 2      # weights (bf16)
                      + num_layers * d_pad * 4              # biases (f32)
                      + tm1 * d_pad * 2)                    # H tile (bf16)
    h_concat = pl.pallas_call(
        functools.partial(_mlp_kernel, num_layers=num_layers),
        out_shape=jax.ShapeDtypeStruct((n_pad, k_pad), jnp.bfloat16),
        grid_spec=pltpu.PrefetchScalarGridSpec(
            num_scalar_prefetch=0,
            grid=(num_rel, n_pad // tm1),
            in_specs=[
                pl.BlockSpec((tm1, d_pad), lambda r, i: (i, 0)),
                pl.BlockSpec((1, num_layers, d_pad, d_pad),
                             lambda r, i: (r, 0, 0, 0)),
                pl.BlockSpec((1, num_layers, 1, d_pad),
                             lambda r, i: (r, 0, 0, 0)),
            ],
            out_specs=pl.BlockSpec((tm1, d_pad), lambda r, i: (i, r)),
        ),
        compiler_params=pltpu.CompilerParams(
            dimension_semantics=(pltpu.PARALLEL, pltpu.PARALLEL),
            vmem_limit_bytes=_vmem_limit(s1_block_bytes),
        ),
        cost_estimate=pl.CostEstimate(
            flops=2 * num_rel * num_layers * n_pad * d_pad * d_pad,
            transcendentals=num_rel * num_layers * n_pad * d_pad,
            bytes_accessed=(2 * num_rel * n_pad * d_pad
                            + 2 * w_stacked.size + 4 * b_stacked.size
                            + 2 * n_pad * k_pad),
        ),
    )(z_pad, w_stacked, b_stacked)

    # -------- stage 2:  A = H @ H.T  (relation sum folded into K) -----------
    tm = _pick_tile(n_pad, 512)
    tn = _pick_tile(n_pad, 512)
    tk = _pick_tile(k_pad, 512)
    s2_block_bytes = (tm * tk * 2 + tn * tk * 2      # two H tiles (bf16)
                      + tm * tn * 4                  # output tile (f32)
                      + tm * tn * 4)                 # accumulator scratch
    out_pad = pl.pallas_call(
        _hht_kernel,
        out_shape=jax.ShapeDtypeStruct((n_pad, n_pad), jnp.float32),
        grid_spec=pltpu.PrefetchScalarGridSpec(
            num_scalar_prefetch=0,
            grid=(n_pad // tm, n_pad // tn, k_pad // tk),
            in_specs=[
                pl.BlockSpec((tm, tk), lambda i, j, k: (i, k)),
                pl.BlockSpec((tn, tk), lambda i, j, k: (j, k)),
            ],
            out_specs=pl.BlockSpec((tm, tn), lambda i, j, k: (i, j)),
            scratch_shapes=[pltpu.VMEM((tm, tn), jnp.float32)],
        ),
        compiler_params=pltpu.CompilerParams(
            dimension_semantics=(pltpu.PARALLEL, pltpu.PARALLEL,
                                 pltpu.ARBITRARY),
            vmem_limit_bytes=_vmem_limit(s2_block_bytes),
        ),
        cost_estimate=pl.CostEstimate(
            flops=2 * n_pad * n_pad * k_pad,
            transcendentals=0,
            bytes_accessed=2 * 2 * n_pad * k_pad + 4 * n_pad * n_pad,
        ),
    )(h_concat, h_concat)

    return out_pad[:n, :n]


def init_params(key, in_size, layers, num_of_relations):
    """Deterministic init matching torch.nn.Linear's uniform(-1/sqrt(fan_in))."""
    params = []
    dims = [in_size] + list(layers)
    for _ in range(num_of_relations):
        layer_params = []
        for l in range(len(layers)):
            key, kw, kb = jax.random.split(key, 3)
            fan_in, fan_out = dims[l], dims[l + 1]
            bound = 1.0 / math.sqrt(fan_in)
            w = jax.random.uniform(kw, (fan_in, fan_out), jnp.float32,
                                   minval=-bound, maxval=bound)
            b = jax.random.uniform(kb, (fan_out,), jnp.float32,
                                   minval=-bound, maxval=bound)
            layer_params.append((w, b))
        params.append(layer_params)
    return params, key


if __name__ == "__main__":
    key = jax.random.PRNGKey(0)

    N = 200               # number of nodes (not a multiple of 128 -> exercises padding)
    IN_SIZE = 32          # z feature size
    LAYERS = [64, 48]     # node_mlp layer sizes
    NUM_RELATIONS = 3     # num_of_relations

    params, key = init_params(key, IN_SIZE, LAYERS, NUM_RELATIONS)
    key, kz = jax.random.split(key)
    z = jax.random.normal(kz, (N, IN_SIZE), jnp.float32)

    out = maped_inner_product_decoder(z, params)
    out = jax.block_until_ready(out)
    assert out.shape == (N, N)

    # Reference 1: mirrors the kernel's bf16-operand / f32-accumulate precision.
    # Reference 2: full-precision f32 (exact PyTorch semantics).
    hp = jax.lax.Precision.HIGHEST
    ref_bf16 = jnp.zeros((N, N), jnp.float32)
    ref_f32 = jnp.zeros((N, N), jnp.float32)
    for layer_params in params:
        hb = z
        hf = z
        for (w, b) in layer_params:
            hb = jnp.tanh(jnp.dot(hb.astype(jnp.bfloat16), w.astype(jnp.bfloat16),
                                  preferred_element_type=jnp.float32) + b)
            hf = jnp.tanh(jnp.dot(hf, w, precision=hp) + b)
        hbb = hb.astype(jnp.bfloat16)
        ref_bf16 = ref_bf16 + jnp.dot(hbb, hbb.T,
                                      preferred_element_type=jnp.float32)
        ref_f32 = ref_f32 + jnp.dot(hf, hf.T, precision=hp)

    # (1) kernel matches the bf16/f32-accumulate arithmetic it implements.
    err_mirror = float(jnp.max(jnp.abs(out - ref_bf16)))
    assert jnp.allclose(out, ref_bf16, atol=2e-2, rtol=2e-2), err_mirror
    # (2) result stays close to full-f32 PyTorch semantics (bf16-level error).
    rel_fro = float(jnp.linalg.norm(out - ref_f32) / jnp.linalg.norm(ref_f32))
    assert rel_fro < 5e-2, rel_fro

    print("KERNEL_OK")
</pallas_src>

<mosaic_0001>
module attributes {stable_mosaic.version = 11 : i64} {
  func.func @_mlp_kernel(%arg0: i32, %arg1: i32, %arg2: memref<256x128xbf16, #tpu.memory_space<vmem>>, %arg3: memref<1x2x128x128xbf16, #tpu.memory_space<vmem>>, %arg4: memref<1x2x1x128xf32, #tpu.memory_space<vmem>>, %arg5: memref<256x128xbf16, #tpu.memory_space<vmem>>) attributes {dimension_semantics = [#tpu.dimension_semantics<parallel>, #tpu.dimension_semantics<parallel>], iteration_bounds = array<i64: 3, 1>, scalar_prefetch = 0 : i64, scratch_operands = 0 : i64, tpu.core_type = #tpu.core_type<tc>, window_params = [{transform_indices = @transform_0, window_bounds = array<i64: 256, 128>}, {transform_indices = @transform_1, window_bounds = array<i64: 1, 2, 128, 128>}, {transform_indices = @transform_2, window_bounds = array<i64: 1, 2, 1, 128>}, {transform_indices = @transform_3, window_bounds = array<i64: 256, 128>}]} {
    %c0 = arith.constant 0 : index
    %c0_0 = arith.constant 0 : index
    %0 = vector.load %arg2[%c0, %c0_0] : memref<256x128xbf16, #tpu.memory_space<vmem>>, vector<256x128xbf16>
    %c0_1 = arith.constant 0 : index
    %c0_2 = arith.constant 0 : index
    %c0_3 = arith.constant 0 : index
    %c0_4 = arith.constant 0 : index
    %1 = vector.load %arg3[%c0_1, %c0_2, %c0_3, %c0_4] : memref<1x2x128x128xbf16, #tpu.memory_space<vmem>>, vector<1x1x128x128xbf16>
    %2 = vector.shape_cast %1 : vector<1x1x128x128xbf16> to vector<128x128xbf16>
    %cst = arith.constant dense<0.000000e+00> : vector<256x128xf32>
    %3 = tpu.matmul %0, %2, %cst {dimension_numbers = #tpu.dot_dimension_numbers<[1], [0], [0], [1], [0, 0, 1, 1], [], []>} : vector<256x128xbf16>, vector<128x128xbf16>, vector<256x128xf32> -> vector<256x128xf32>
    %c0_5 = arith.constant 0 : index
    %c0_6 = arith.constant 0 : index
    %c0_7 = arith.constant 0 : index
    %c0_8 = arith.constant 0 : index
    %4 = vector.load %arg4[%c0_5, %c0_6, %c0_7, %c0_8] : memref<1x2x1x128xf32, #tpu.memory_space<vmem>>, vector<1x1x1x128xf32>
    %5 = vector.shape_cast %4 : vector<1x1x1x128xf32> to vector<1x128xf32>
    %6 = vector.broadcast %5 : vector<1x128xf32> to vector<256x128xf32>
    %7 = arith.addf %3, %6 : vector<256x128xf32>
    %8 = math.tanh %7 : vector<256x128xf32>
    %9 = arith.truncf %8 : vector<256x128xf32> to vector<256x128xbf16>
    %c0_9 = arith.constant 0 : index
    %c1 = arith.constant 1 : index
    %c0_10 = arith.constant 0 : index
    %c0_11 = arith.constant 0 : index
    %10 = vector.load %arg3[%c0_9, %c1, %c0_10, %c0_11] : memref<1x2x128x128xbf16, #tpu.memory_space<vmem>>, vector<1x1x128x128xbf16>
    %11 = vector.shape_cast %10 : vector<1x1x128x128xbf16> to vector<128x128xbf16>
    %cst_12 = arith.constant dense<0.000000e+00> : vector<256x128xf32>
    %12 = tpu.matmul %9, %11, %cst_12 {dimension_numbers = #tpu.dot_dimension_numbers<[1], [0], [0], [1], [0, 0, 1, 1], [], []>} : vector<256x128xbf16>, vector<128x128xbf16>, vector<256x128xf32> -> vector<256x128xf32>
    %c0_13 = arith.constant 0 : index
    %c1_14 = arith.constant 1 : index
    %c0_15 = arith.constant 0 : index
    %c0_16 = arith.constant 0 : index
    %13 = vector.load %arg4[%c0_13, %c1_14, %c0_15, %c0_16] : memref<1x2x1x128xf32, #tpu.memory_space<vmem>>, vector<1x1x1x128xf32>
    %14 = vector.shape_cast %13 : vector<1x1x1x128xf32> to vector<1x128xf32>
    %15 = vector.broadcast %14 : vector<1x128xf32> to vector<256x128xf32>
    %16 = arith.addf %12, %15 : vector<256x128xf32>
    %17 = math.tanh %16 : vector<256x128xf32>
    %18 = arith.truncf %17 : vector<256x128xf32> to vector<256x128xbf16>
    %c0_17 = arith.constant 0 : index
    %c0_18 = arith.constant 0 : index
    %19 = vector.load %arg5[%c0_17, %c0_18] : memref<256x128xbf16, #tpu.memory_space<vmem>>, vector<256x128xbf16>
    tpu.vector_store %arg5[%c0_17, %c0_18], %18 {strides = array<i32>} : memref<256x128xbf16, #tpu.memory_space<vmem>>, vector<256x128xbf16>,
    return
  }
  func.func @transform_0(%arg0: i32, %arg1: i32) -> (i32, i32) {
    %c0_i32 = arith.constant 0 : i32
    %c0_i32_0 = arith.constant 0 : i32
    return %arg1, %c0_i32 : i32, i32
  }
  func.func @transform_1(%arg0: i32, %arg1: i32) -> (i32, i32, i32, i32) {
    %c0_i32 = arith.constant 0 : i32
    %c0_i32_0 = arith.constant 0 : i32
    %c0_i32_1 = arith.constant 0 : i32
    %c0_i32_2 = arith.constant 0 : i32
    return %arg0, %c0_i32, %c0_i32_0, %c0_i32_1 : i32, i32, i32, i32
  }
  func.func @transform_2(%arg0: i32, %arg1: i32) -> (i32, i32, i32, i32) {
    %c0_i32 = arith.constant 0 : i32
    %c0_i32_0 = arith.constant 0 : i32
    %c0_i32_1 = arith.constant 0 : i32
    %c0_i32_2 = arith.constant 0 : i32
    return %arg0, %c0_i32, %c0_i32_0, %c0_i32_1 : i32, i32, i32, i32
  }
  func.func @transform_3(%arg0: i32, %arg1: i32) -> (i32, i32) {
    %c0_i32 = arith.constant 0 : i32
    return %arg1, %arg0 : i32, i32
  }
}

</mosaic_0001>

<llo_original>
// kernel: tpu_custom_call.1
$region0: #{tpu_custom_call.1}
  #allocation0 [shape = 'u32[]', space=smem, size = 0x4, offset = 0x4, fixed_abs, tag = 'smem constant byte address 0x4 - core index']
  #allocation1 [shape = 'u32[72,128]{1,0:T(1,128)}', space=vmem, size = 0x9000, scoped, tag = 'internal scratch']
  %s0 = inlined_call_operand.hbm [shape: bf16[256,128], index: 0, kind: input, shape index: {}]
  %s1 = inlined_call_operand.hbm [shape: bf16[3,2,128,128], index: 1, kind: input, shape index: {}]
  %s2 = inlined_call_operand.hbm [shape: f32[3,2,1,128], index: 2, kind: input, shape index: {}]
  %s3 = inlined_call_operand.hbm [shape: bf16[256,384], index: 3, kind: output, shape index: {}]
  %s4 = sld [smem:[#allocation0]]
  $region57: #{tpu_custom_call.1} parent=0
    _
  %s6 = ssub.s32 1, %s4
  %s7 = scalar_select 0, %s6, %s4
  $region1: #{tpu_custom_call.1} parent=0
    #allocation2 [shape = 'u8[65536]{0}', space=vmem, size = 0x10000, scoped, tag = 'input window, operand 0, single buffered']
    #allocation3 [shape = 's32[2]{0}', space=sflag, size = 0x8, scoped, tag = 'scoped memory for tpu_custom_call.1']
    #allocation4 [shape = 's32[2]{0}', space=sflag, size = 0x8, scoped, tag = 'scoped memory for tpu_custom_call.1']
    #allocation5 [shape = 'u8[131072]{0}', space=vmem, size = 0x20000, scoped, tag = 'input window, operand 1']
    #allocation6 [shape = 's32[2]{0}', space=sflag, size = 0x8, scoped, tag = 'scoped memory for tpu_custom_call.1']
    #allocation7 [shape = 'u8[2048]{0}', space=vmem, size = 0x800, scoped, tag = 'input window, operand 2']
    #allocation8 [shape = 'u8[131072]{0}', space=vmem, size = 0x20000, scoped, tag = 'output window, operand 0']
    %8 = vsyncpa [#allocation3], 0
    %9 = vsyncpa [#allocation6], 0
    %s10 = scalar_lea.sflag [#allocation6], 1
    %11 = vsyncpa %s10, 0
    %12 = vsyncpa [#allocation4], 0
    %s13 = scalar_lea.sflag [#allocation4], 1
    %14 = vsyncpa %s13, 0
    loop: start=0, step=1, limit=5
    $region2: #{tpu_custom_call.1} parent=1 // loop_pre_header
      _
    $region3: #{tpu_custom_call.1} parent=1 // loop_header
      %s16 = sphi 0, %s20
      %p17 = scmp.ge.s32.totalorder %s16, 5
      %s23 = sphi 0, %s35
      %s24 = sphi 0, %s31
      %s25 = sphi 0, %s23
      %s26 = sphi 0, %s24
      %s27 = sphi 0, %s25
      %s28 = sphi 0, %s26
      %s38 = sphi 0, %s40
      %s41 = sphi 0, %s38
      %s42 = sphi 0, %s41
      %s58 = sphi 0, %s42
      %s64 = sphi 0, %s66
      %s67 = sphi 0, %s64
      %s68 = sphi 0, %s67
      %s84 = sphi 0, %s68
      %s90 = sphi 0, %s92
      %s93 = sphi 0, %s90
      %s94 = sphi 0, %s93
      %s110 = sphi 0, %s94
      %s118 = sphi 0, %s120
      %s121 = sphi 0, %s118
      %s122 = sphi 0, %s121
      %s138 = sphi 0, %s122
    $region4: #{tpu_custom_call.1} parent=1 // loop_header_branch
      %19 = sbr.rel (%p17) target = $region8
    $region5: #{tpu_custom_call.1} parent=1 // loop_body
      %s21 = ssub.s32 %s16, 1
      %s22 = ssub.s32 %s16, 2
      %s29 = sadd.s32 1, %s24
      %p30 = scmp.ge.s32.totalorder %s29, 1
      %s31 = scalar_select %p30, 0, %s29
      %s32 = sadd.s32 1, %s23
      %s33 = scalar_select %p30, %s32, %s23
      %p34 = scmp.ge.s32.totalorder %s33, 3
      %s35 = scalar_select %p34, 0, %s33
      %s36 = ssub.s32 %s24, %s31
      %p37 = scmp.eq.s32.totalorder %s36, 0
      %s39 = sadd.s32 %s38, 1
      %s40 = scalar_select %p37, %s38, %s39
      %p43 = pneg %p37
      %p44 = scmp.eq.s32.totalorder %s16, 2
      %p45 = por %p43, %p44
      %p46 = scmp.ne.s32.totalorder %s38, %s41
      %p47 = scmp.eq.s32.totalorder %s16, 0
      %p48 = por %p46, %p47
      %p49 = scmp.ne.s32.totalorder %s38, %s41
      %p50 = scmp.eq.s32.totalorder %s21, 2
      %p51 = por %p49, %p50
      %p52 = scmp.ne.s32.totalorder %s41, %s42
      %p53 = scmp.eq.s32.totalorder %s21, 0
      %p54 = por %p52, %p53
      %p55 = scmp.ne.s32.totalorder %s41, %s42
      %p56 = scmp.eq.s32.totalorder %s22, 2
      %p57 = por %p55, %p56
      %p59 = scmp.ne.s32.totalorder %s42, %s58
      %p60 = scmp.eq.s32.totalorder %s22, 0
      %p61 = por %p59, %p60
      %s62 = ssub.s32 %s23, %s35
      %p63 = scmp.eq.s32.totalorder %s62, 0
      %s65 = sadd.s32 %s64, 1
      %s66 = scalar_select %p63, %s64, %s65
      %p69 = pneg %p63
      %p70 = scmp.eq.s32.totalorder %s16, 2
      %p71 = por %p69, %p70
      %p72 = scmp.ne.s32.totalorder %s64, %s67
      %p73 = scmp.eq.s32.totalorder %s16, 0
      %p74 = por %p72, %p73
      %p75 = scmp.ne.s32.totalorder %s64, %s67
      %p76 = scmp.eq.s32.totalorder %s21, 2
      %p77 = por %p75, %p76
      %p78 = scmp.ne.s32.totalorder %s67, %s68
      %p79 = scmp.eq.s32.totalorder %s21, 0
      %p80 = por %p78, %p79
      %p81 = scmp.ne.s32.totalorder %s67, %s68
      %p82 = scmp.eq.s32.totalorder %s22, 2
      %p83 = por %p81, %p82
      %p85 = scmp.ne.s32.totalorder %s68, %s84
      %p86 = scmp.eq.s32.totalorder %s22, 0
      %p87 = por %p85, %p86
      %s88 = ssub.s32 %s23, %s35
      %p89 = scmp.eq.s32.totalorder %s88, 0
      %s91 = sadd.s32 %s90, 1
      %s92 = scalar_select %p89, %s90, %s91
      %p95 = pneg %p89
      %p96 = scmp.eq.s32.totalorder %s16, 2
      %p97 = por %p95, %p96
      %p98 = scmp.ne.s32.totalorder %s90, %s93
      %p99 = scmp.eq.s32.totalorder %s16, 0
      %p100 = por %p98, %p99
      %p101 = scmp.ne.s32.totalorder %s90, %s93
      %p102 = scmp.eq.s32.totalorder %s21, 2
      %p103 = por %p101, %p102
      %p104 = scmp.ne.s32.totalorder %s93, %s94
      %p105 = scmp.eq.s32.totalorder %s21, 0
      %p106 = por %p104, %p105
      %p107 = scmp.ne.s32.totalorder %s93, %s94
      %p108 = scmp.eq.s32.totalorder %s22, 2
      %p109 = por %p107, %p108
      %p111 = scmp.ne.s32.totalorder %s94, %s110
      %p112 = scmp.eq.s32.totalorder %s22, 0
      %p113 = por %p111, %p112
      %s114 = ssub.s32 %s24, %s31
      %s115 = ssub.s32 %s23, %s35
      %s116 = sor.u32 %s114, %s115
      %p117 = scmp.eq.s32.totalorder %s116, 0
      %s119 = sadd.s32 %s118, 1
      %s120 = scalar_select %p117, %s118, %s119
      %p123 = pneg %p117
      %p124 = scmp.eq.s32.totalorder %s16, 2
      %p125 = por %p123, %p124
      %p126 = scmp.ne.s32.totalorder %s118, %s121
      %p127 = scmp.eq.s32.totalorder %s16, 0
      %p128 = por %p126, %p127
      %p129 = scmp.ne.s32.totalorder %s118, %s121
      %p130 = scmp.eq.s32.totalorder %s21, 2
      %p131 = por %p129, %p130
      %p132 = scmp.ne.s32.totalorder %s121, %s122
      %p133 = scmp.eq.s32.totalorder %s21, 0
      %p134 = por %p132, %p133
      %p135 = scmp.ne.s32.totalorder %s121, %s122
      %p136 = scmp.eq.s32.totalorder %s22, 2
      %p137 = por %p135, %p136
      %p139 = scmp.ne.s32.totalorder %s122, %s138
      %p140 = scmp.eq.s32.totalorder %s22, 0
      %p141 = por %p139, %p140
      %p142 = scmp.le.s32.totalorder 1, %s16
      %p143 = scmp.lt.s32.totalorder %s16, 4
      %p144 = pnand %p142, %p143
      %p145 = pneg %p144
      // Predicated region
      $region9: #{tpu_custom_call.1} parent=5 // pred_check
        _
      $region10: #{tpu_custom_call.1} parent=5 // pred_check_branch
        %147 = sbr.rel (%p144) target = $region12
      $region11: #{tpu_custom_call.1} parent=5 // pred_region
        %s148 = ssub.s32 %s16, 1
        // Predicated region
        $region13: #{tpu_custom_call.1} parent=11 // pred_check
          %p149 = pneg %p54
        $region14: #{tpu_custom_call.1} parent=11 // pred_check_branch
          %151 = sbr.rel (%p149) target = $region16
        $region15: #{tpu_custom_call.1} parent=11 // pred_region
          %s152 = smul.u32 32, %s26
          %154 = vsyncadd [#allocation3], 0
          %s155 = smul.addr %s152, 4
          %s156 = scalar_lea.hbm %s0, %s155
          %s157 = sshll.u32 %s156, 4
          %s158 = int_to_ptr.hbm [resolvable:$true] %s157
          %s159 = sshll.u32 [#allocation2], 4
          %s160 = int_to_ptr.vmem [resolvable:$true] %s159
          %165 = dma.hbm_to_vmem [thread:$0]  %s158, 2048, %s160, [#allocation3], 64, 64, 4
        $region16: #{tpu_custom_call.1} parent=11 // pred_fallthru
          _
      $region12: #{tpu_custom_call.1} parent=5 // pred_fallthru
        _
      %p166 = scmp.lt.s32.totalorder %s16, 3
      // Predicated region
      $region17: #{tpu_custom_call.1} parent=5 // pred_check
        %p167 = pneg %p166
      $region18: #{tpu_custom_call.1} parent=5 // pred_check_branch
        %169 = sbr.rel (%p167) target = $region20
      $region19: #{tpu_custom_call.1} parent=5 // pred_region
        // Predicated region
        $region21: #{tpu_custom_call.1} parent=19 // pred_check
          %p170 = pneg %p74
        $region22: #{tpu_custom_call.1} parent=19 // pred_check_branch
          %172 = sbr.rel (%p170) target = $region24
        $region23: #{tpu_custom_call.1} parent=19 // pred_region
          %s173 = sand.u32 %s16, 1
          %s174 = scalar_lea.sflag [#allocation6], %s173
          %s175 = sand.u32 %s64, 1
          %s176 = smul.addr %s175, 128
          %s177 = scalar_lea.vmem [#allocation5], %s176
          %179 = vsyncadd %s174, 0
          %s180 = smul.addr %s23, 32
          %s181 = smul.addr %s180, 4
          %s182 = scalar_lea.hbm %s1, %s181
          %s183 = sshll.u32 %s182, 4
          %s184 = int_to_ptr.hbm [resolvable:$true] %s183
          %s185 = sshll.u32 %s177, 4
          %s186 = int_to_ptr.vmem [resolvable:$true] %s185
          %191 = dma.hbm_to_vmem [thread:$0]  %s184, 2048, %s186, %s174, 64, 64, 4
        $region24: #{tpu_custom_call.1} parent=19 // pred_fallthru
          _
        // Predicated region
        $region25: #{tpu_custom_call.1} parent=19 // pred_check
          %p192 = pneg %p100
        $region26: #{tpu_custom_call.1} parent=19 // pred_check_branch
          %194 = sbr.rel (%p192) target = $region28
        $region27: #{tpu_custom_call.1} parent=19 // pred_region
          %s195 = sand.u32 %s16, 1
          %s196 = scalar_lea.sflag [#allocation6], %s195
          %s197 = sand.u32 %s90, 1
          %s198 = smul.addr %s197, 2
          %s199 = scalar_lea.vmem [#allocation7], %s198
          %201 = vsyncadd %s196, 0
          %s202 = smul.addr %s23, 2
          %s203 = scalar_lea.hbm %s2, %s202
          %s204 = sshll.u32 %s203, 4
          %s205 = int_to_ptr.hbm [resolvable:$true] %s204
          %s206 = sshll.u32 %s199, 4
          %s207 = int_to_ptr.vmem [resolvable:$true] %s206
          %212 = dma.hbm_to_vmem [thread:$0]  %s205, 32, %s207, %s196, 16, 16, 1
        $region28: #{tpu_custom_call.1} parent=19 // pred_fallthru
          _
      $region20: #{tpu_custom_call.1} parent=5 // pred_fallthru
        _
      %p213 = scmp.le.s32.totalorder 1, %s16
      %p214 = scmp.lt.s32.totalorder %s16, 4
      %p215 = pnand %p213, %p214
      %p216 = pneg %p215
      // Predicated region
      $region29: #{tpu_custom_call.1} parent=5 // pred_check
        _
      $region30: #{tpu_custom_call.1} parent=5 // pred_check_branch
        %218 = sbr.rel (%p215) target = $region32
      $region31: #{tpu_custom_call.1} parent=5 // pred_region
        %s219 = ssub.s32 %s16, 1
        // Predicated region
        $region33: #{tpu_custom_call.1} parent=31 // pred_check
          %p220 = pneg %p54
        $region34: #{tpu_custom_call.1} parent=31 // pred_check_branch
          %222 = sbr.rel (%p220) target = $region36
        $region35: #{tpu_custom_call.1} parent=31 // pred_region
          %224 = dma.done [#allocation3], 2048
        $region36: #{tpu_custom_call.1} parent=31 // pred_fallthru
          _
        %s225 = sand.u32 %s21, 1
        %s226 = scalar_lea.sflag [#allocation6], %s225
        %s227 = sand.u32 %s67, 1
        %s228 = smul.addr %s227, 128
        %s229 = scalar_lea.vmem [#allocation5], %s228
        // Predicated region
        $region37: #{tpu_custom_call.1} parent=31 // pred_check
          %p230 = pneg %p80
        $region38: #{tpu_custom_call.1} parent=31 // pred_check_branch
          %232 = sbr.rel (%p230) target = $region40
        $region39: #{tpu_custom_call.1} parent=31 // pred_region
          %234 = dma.done %s226, 2048
        $region40: #{tpu_custom_call.1} parent=31 // pred_fallthru
          _
        %s235 = sand.u32 %s21, 1
        %s236 = scalar_lea.sflag [#allocation6], %s235
        %s237 = sand.u32 %s93, 1
        %s238 = smul.addr %s237, 2
        %s239 = scalar_lea.vmem [#allocation7], %s238
        // Predicated region
        $region41: #{tpu_custom_call.1} parent=31 // pred_check
          %p240 = pneg %p106
        $region42: #{tpu_custom_call.1} parent=31 // pred_check_branch
          %242 = sbr.rel (%p240) target = $region44
        $region43: #{tpu_custom_call.1} parent=31 // pred_region
          %244 = dma.done %s236, 32
        $region44: #{tpu_custom_call.1} parent=31 // pred_fallthru
          _
        %p245 = pneg %p54
        %p246 = pneg %p51
        %s247 = sand.u32 %s21, 1
        %s248 = scalar_lea.sflag [#allocation6], %s247
        %s249 = sand.u32 %s67, 1
        %s250 = smul.addr %s249, 128
        %s251 = scalar_lea.vmem [#allocation5], %s250
        %p252 = pneg %p80
        %p253 = pneg %p77
        %s254 = sand.u32 %s21, 1
        %s255 = scalar_lea.sflag [#allocation6], %s254
        %s256 = sand.u32 %s93, 1
        %s257 = smul.addr %s256, 2
        %s258 = scalar_lea.vmem [#allocation7], %s257
        %p259 = pneg %p106
        %p260 = pneg %p103
        %p261 = pneg %p134
        %p262 = pneg %p131
        %s263 = sand.u32 %s121, 1
        %s264 = scalar_lea.sflag [#allocation4], %s263
        %s265 = sand.u32 %s121, 1
        %s266 = smul.addr %s265, 128
        %s267 = scalar_lea.vmem [#allocation8], %s266
        %s268 = smul.u32 32, %s26
        %s269 = smul.u32 32, %s26
        %v270 = vld [vmem:[#allocation2] sm:$0xf]
        %v271 = vld [vmem:[#allocation2 + $0x4] sm:$0xf]
        %v272 = vld [vmem:[#allocation2 + $0x8] sm:$0xf]
        %v273 = vld [vmem:[#allocation2 + $0xc] sm:$0xf]
        %v274 = vld [vmem:[#allocation2 + $0x10] sm:$0xf]
        %v275 = vld [vmem:[#allocation2 + $0x14] sm:$0xf]
        %v276 = vld [vmem:[#allocation2 + $0x18] sm:$0xf]
        %v277 = vld [vmem:[#allocation2 + $0x1c] sm:$0xf]
        %v278 = vld [vmem:[#allocation2 + $0x20] sm:$0xf]
        %v279 = vld [vmem:[#allocation2 + $0x24] sm:$0xf]
        %v280 = vld [vmem:[#allocation2 + $0x28] sm:$0xf]
        %v281 = vld [vmem:[#allocation2 + $0x2c] sm:$0xf]
        %v282 = vld [vmem:[#allocation2 + $0x30] sm:$0xf]
        %v283 = vld [vmem:[#allocation2 + $0x34] sm:$0xf]
        %v284 = vld [vmem:[#allocation2 + $0x38] sm:$0xf]
        %v285 = vld [vmem:[#allocation2 + $0x3c] sm:$0xf]
        %v286 = vld [vmem:[#allocation2 + $0x40] sm:$0xf]
        %v287 = vld [vmem:[#allocation2 + $0x44] sm:$0xf]
        %v288 = vld [vmem:[#allocation2 + $0x48] sm:$0xf]
        %v289 = vld [vmem:[#allocation2 + $0x4c] sm:$0xf]
        %v290 = vld [vmem:[#allocation2 + $0x50] sm:$0xf]
        %v291 = vld [vmem:[#allocation2 + $0x54] sm:$0xf]
        %v292 = vld [vmem:[#allocation2 + $0x58] sm:$0xf]
        %v293 = vld [vmem:[#allocation2 + $0x5c] sm:$0xf]
        %v294 = vld [vmem:[#allocation2 + $0x60] sm:$0xf]
        %v295 = vld [vmem:[#allocation2 + $0x64] sm:$0xf]
        %v296 = vld [vmem:[#allocation2 + $0x68] sm:$0xf]
        %v297 = vld [vmem:[#allocation2 + $0x6c] sm:$0xf]
        %v298 = vld [vmem:[#allocation2 + $0x70] sm:$0xf]
        %v299 = vld [vmem:[#allocation2 + $0x74] sm:$0xf]
        %v300 = vld [vmem:[#allocation2 + $0x78] sm:$0xf]
        %v301 = vld [vmem:[#allocation2 + $0x7c] sm:$0xf]
        %v302 = vld [vmem:[%s229] sm:$0xf]
        %v303 = vld [vmem:[%s229 + $0x4] sm:$0xf]
        %v304 = vld [vmem:[%s229 + $0x8] sm:$0xf]
        %v305 = vld [vmem:[%s229 + $0xc] sm:$0xf]
        %v306 = vld [vmem:[%s229 + $0x10] sm:$0xf]
        %v307 = vld [vmem:[%s229 + $0x14] sm:$0xf]
        %v308 = vld [vmem:[%s229 + $0x18] sm:$0xf]
        %v309 = vld [vmem:[%s229 + $0x1c] sm:$0xf]
        %v310 = vld [vmem:[%s229 + $0x20] sm:$0xf]
        %v311 = vld [vmem:[%s229 + $0x24] sm:$0xf]
        %v312 = vld [vmem:[%s229 + $0x28] sm:$0xf]
        %v313 = vld [vmem:[%s229 + $0x2c] sm:$0xf]
        %v314 = vld [vmem:[%s229 + $0x30] sm:$0xf]
        %v315 = vld [vmem:[%s229 + $0x34] sm:$0xf]
        %v316 = vld [vmem:[%s229 + $0x38] sm:$0xf]
        %v317 = vld [vmem:[%s229 + $0x3c] sm:$0xf]
        %v318 = vld [vmem:[%s239] sm:$0x1]
        %v320 = vperm.slane %v318, 0
        %v354 = vunpack.c.l.b16 %v270
        %v355 = vunpack.c.l.b16 %v271
        %v356 = vunpack.c.l.b16 %v272
        %v357 = vunpack.c.l.b16 %v273
        %v358 = vunpack.c.l.b16 %v274
        %v359 = vunpack.c.l.b16 %v275
        %v360 = vunpack.c.l.b16 %v276
        %v361 = vunpack.c.l.b16 %v277
        %v362 = vunpack.c.l.b16 %v278
        %v363 = vunpack.c.l.b16 %v279
        %v364 = vunpack.c.l.b16 %v280
        %v365 = vunpack.c.l.b16 %v281
        %v366 = vunpack.c.l.b16 %v282
        %v367 = vunpack.c.l.b16 %v283
        %v368 = vunpack.c.l.b16 %v284
        %v369 = vunpack.c.l.b16 %v285
        %v370 = vunpack.c.l.b16 %v286
        %v371 = vunpack.c.l.b16 %v287
        %v372 = vunpack.c.l.b16 %v288
        %v373 = vunpack.c.l.b16 %v289
        %v374 = vunpack.c.l.b16 %v290
        %v375 = vunpack.c.l.b16 %v291
        %v376 = vunpack.c.l.b16 %v292
        %v377 = vunpack.c.l.b16 %v293
        %v378 = vunpack.c.l.b16 %v294
        %v379 = vunpack.c.l.b16 %v295
        %v380 = vunpack.c.l.b16 %v296
        %v381 = vunpack.c.l.b16 %v297
        %v382 = vunpack.c.l.b16 %v298
        %v383 = vunpack.c.l.b16 %v299
        %v384 = vunpack.c.l.b16 %v300
        %v385 = vunpack.c.l.b16 %v301
        %v386 = vpack.c.b16 %v355, %v354
        %v387 = vpack.c.b16 %v357, %v356
        %v388 = vpack.c.b16 %v359, %v358
        %v389 = vpack.c.b16 %v361, %v360
        %v390 = vpack.c.b16 %v363, %v362
        %v391 = vpack.c.b16 %v365, %v364
        %v392 = vpack.c.b16 %v367, %v366
        %v393 = vpack.c.b16 %v369, %v368
        %v394 = vpack.c.b16 %v371, %v370
        %v395 = vpack.c.b16 %v373, %v372
        %v396 = vpack.c.b16 %v375, %v374
        %v397 = vpack.c.b16 %v377, %v376
        %v398 = vpack.c.b16 %v379, %v378
        %v399 = vpack.c.b16 %v381, %v380
        %v400 = vpack.c.b16 %v383, %v382
        %v401 = vpack.c.b16 %v385, %v384
        %v434 = vunpack.c.l.b16 %v302
        %v435 = vunpack.c.l.b16 %v303
        %v436 = vunpack.c.l.b16 %v304
        %v437 = vunpack.c.l.b16 %v305
        %v438 = vunpack.c.l.b16 %v306
        %v439 = vunpack.c.l.b16 %v307
        %v440 = vunpack.c.l.b16 %v308
        %v441 = vunpack.c.l.b16 %v309
        %v442 = vunpack.c.l.b16 %v310
        %v443 = vunpack.c.l.b16 %v311
        %v444 = vunpack.c.l.b16 %v312
        %v445 = vunpack.c.l.b16 %v313
        %v446 = vunpack.c.l.b16 %v314
        %v447 = vunpack.c.l.b16 %v315
        %v448 = vunpack.c.l.b16 %v316
        %v449 = vunpack.c.l.b16 %v317
        %v450 = vpack.c.b16 %v435, %v434
        %v451 = vpack.c.b16 %v437, %v436
        %v452 = vpack.c.b16 %v439, %v438
        %v453 = vpack.c.b16 %v441, %v440
        %v454 = vpack.c.b16 %v443, %v442
        %v455 = vpack.c.b16 %v445, %v444
        %v456 = vpack.c.b16 %v447, %v446
        %v457 = vpack.c.b16 %v449, %v448
        %466 = vmatpush.bf16.msra.mxu0 %v457
        %467 = vmatpush.bf16.msra.mxu0 %v456
        %468 = vmatpush.bf16.msra.mxu0 %v455
        %469 = vmatpush.bf16.msra.mxu0 %v454
        %470 = vmatpush.bf16.msra.mxu0 %v453
        %471 = vmatpush.bf16.msra.mxu0 %v452
        %472 = vmatpush.bf16.msra.mxu0 %v451
        %473 = vmatpush.bf16.msra.mxu0 %v450
        %474 = vmatmul.bf16.gmra.mxu0 %v386
        %v475 = vpop.f32.mrf.mxu0
        %v476 = vadd.f32 %v320, %v475
        %v477 = vpop.f32.mrf.mxu0
        %v478 = vadd.f32 %v320, %v477
        %479 = vmatmul.bf16.gmra.mxu0 %v387
        %v480 = vpop.f32.mrf.mxu0
        %v481 = vadd.f32 %v320, %v480
        %v482 = vpop.f32.mrf.mxu0
        %v483 = vadd.f32 %v320, %v482
        %484 = vmatmul.bf16.gmra.mxu0 %v388
        %v485 = vpop.f32.mrf.mxu0
        %v486 = vadd.f32 %v320, %v485
        %v487 = vpop.f32.mrf.mxu0
        %v488 = vadd.f32 %v320, %v487
        %489 = vmatmul.bf16.gmra.mxu0 %v389
        %v490 = vpop.f32.mrf.mxu0
        %v491 = vadd.f32 %v320, %v490
        %v492 = vpop.f32.mrf.mxu0
        %v493 = vadd.f32 %v320, %v492
        %494 = vmatmul.bf16.gmra.mxu0 %v390
        %v495 = vpop.f32.mrf.mxu0
        %v496 = vadd.f32 %v320, %v495
        %v497 = vpop.f32.mrf.mxu0
        %v498 = vadd.f32 %v320, %v497
        %499 = vmatmul.bf16.gmra.mxu0 %v391
        %v500 = vpop.f32.mrf.mxu0
        %v501 = vadd.f32 %v320, %v500
        %v502 = vpop.f32.mrf.mxu0
        %v503 = vadd.f32 %v320, %v502
        %504 = vmatmul.bf16.gmra.mxu0 %v392
        %v505 = vpop.f32.mrf.mxu0
        %v506 = vadd.f32 %v320, %v505
        %v507 = vpop.f32.mrf.mxu0
        %v508 = vadd.f32 %v320, %v507
        %509 = vmatmul.bf16.gmra.mxu0 %v393
        %v510 = vpop.f32.mrf.mxu0
        %v511 = vadd.f32 %v320, %v510
        %v512 = vpop.f32.mrf.mxu0
        %v513 = vadd.f32 %v320, %v512
        %514 = vmatmul.bf16.gmra.mxu0 %v394
        %v515 = vpop.f32.mrf.mxu0
        %v516 = vadd.f32 %v320, %v515
        %v517 = vpop.f32.mrf.mxu0
        %v518 = vadd.f32 %v320, %v517
        %519 = vmatmul.bf16.gmra.mxu0 %v395
        %v520 = vpop.f32.mrf.mxu0
        %v521 = vadd.f32 %v320, %v520
        %v522 = vpop.f32.mrf.mxu0
        %v523 = vadd.f32 %v320, %v522
        %524 = vmatmul.bf16.gmra.mxu0 %v396
        %v525 = vpop.f32.mrf.mxu0
        %v526 = vadd.f32 %v320, %v525
        %v527 = vpop.f32.mrf.mxu0
        %v528 = vadd.f32 %v320, %v527
        %529 = vmatmul.bf16.gmra.mxu0 %v397
        %v530 = vpop.f32.mrf.mxu0
        %v531 = vadd.f32 %v320, %v530
        %v532 = vpop.f32.mrf.mxu0
        %v533 = vadd.f32 %v320, %v532
        %534 = vmatmul.bf16.gmra.mxu0 %v398
        %v535 = vpop.f32.mrf.mxu0
        %v536 = vadd.f32 %v320, %v535
        %v537 = vpop.f32.mrf.mxu0
        %v538 = vadd.f32 %v320, %v537
        %539 = vmatmul.bf16.gmra.mxu0 %v399
        %v540 = vpop.f32.mrf.mxu0
        %v541 = vadd.f32 %v320, %v540
        %v542 = vpop.f32.mrf.mxu0
        %v543 = vadd.f32 %v320, %v542
        %544 = vmatmul.bf16.gmra.mxu0 %v400
        %v545 = vpop.f32.mrf.mxu0
        %v546 = vadd.f32 %v320, %v545
        %v547 = vpop.f32.mrf.mxu0
        %v548 = vadd.f32 %v320, %v547
        %549 = vmatmul.bf16.gmra.mxu0 %v401
        %v550 = vpop.f32.mrf.mxu0
        %v551 = vadd.f32 %v320, %v550
        %v552 = vpop.f32.mrf.mxu0
        %v553 = vadd.f32 %v320, %v552
        %554 = vdwg.mxu0
        %v555 = vtanh.pop %v476
        %v556 = vtanh.pop %v478
        %v557 = vtanh.pop %v481
        %v558 = vtanh.pop %v483
        %v559 = vtanh.pop %v486
        %v560 = vtanh.pop %v488
        %v561 = vtanh.pop %v491
        %v562 = vtanh.pop %v493
        %v563 = vtanh.pop %v496
        %v564 = vtanh.pop %v498
        %v565 = vtanh.pop %v501
        %v566 = vtanh.pop %v503
        %v567 = vtanh.pop %v506
        %v568 = vtanh.pop %v508
        %v569 = vtanh.pop %v511
        %v570 = vtanh.pop %v513
        %v571 = vtanh.pop %v516
        %v572 = vtanh.pop %v518
        %v573 = vtanh.pop %v521
        %v574 = vtanh.pop %v523
        %v575 = vtanh.pop %v526
        %v576 = vtanh.pop %v528
        %v577 = vtanh.pop %v531
        %v578 = vtanh.pop %v533
        %v579 = vtanh.pop %v536
        %v580 = vtanh.pop %v538
        %v581 = vtanh.pop %v541
        %v582 = vtanh.pop %v543
        %v583 = vtanh.pop %v546
        %v584 = vtanh.pop %v548
        %v585 = vtanh.pop %v551
        %v586 = vtanh.pop %v553
        %v587 = vpack.c.bf16 %v556, %v555
        %v588 = vpack.c.bf16 %v558, %v557
        %v589 = vpack.c.bf16 %v560, %v559
        %v590 = vpack.c.bf16 %v562, %v561
        %v591 = vpack.c.bf16 %v564, %v563
        %v592 = vpack.c.bf16 %v566, %v565
        %v593 = vpack.c.bf16 %v568, %v567
        %v594 = vpack.c.bf16 %v570, %v569
        %v595 = vpack.c.bf16 %v572, %v571
        %v596 = vpack.c.bf16 %v574, %v573
        %v597 = vpack.c.bf16 %v576, %v575
        %v598 = vpack.c.bf16 %v578, %v577
        %v599 = vpack.c.bf16 %v580, %v579
        %v600 = vpack.c.bf16 %v582, %v581
        %v601 = vpack.c.bf16 %v584, %v583
        %v602 = vpack.c.bf16 %v586, %v585
        %s603 = scalar_lea.vmem %s229, 64 [#allocation5]
        %v604 = vld [vmem:[%s603] sm:$0xf]
        %v605 = vld [vmem:[%s603 + $0x4] sm:$0xf]
        %v606 = vld [vmem:[%s603 + $0x8] sm:$0xf]
        %v607 = vld [vmem:[%s603 + $0xc] sm:$0xf]
        %v608 = vld [vmem:[%s603 + $0x10] sm:$0xf]
        %v609 = vld [vmem:[%s603 + $0x14] sm:$0xf]
        %v610 = vld [vmem:[%s603 + $0x18] sm:$0xf]
        %v611 = vld [vmem:[%s603 + $0x1c] sm:$0xf]
        %v612 = vld [vmem:[%s603 + $0x20] sm:$0xf]
        %v613 = vld [vmem:[%s603 + $0x24] sm:$0xf]
        %v614 = vld [vmem:[%s603 + $0x28] sm:$0xf]
        %v615 = vld [vmem:[%s603 + $0x2c] sm:$0xf]
        %v616 = vld [vmem:[%s603 + $0x30] sm:$0xf]
        %v617 = vld [vmem:[%s603 + $0x34] sm:$0xf]
        %v618 = vld [vmem:[%s603 + $0x38] sm:$0xf]
        %v619 = vld [vmem:[%s603 + $0x3c] sm:$0xf]
        %s620 = scalar_lea.vmem %s239, 1 [#allocation7]
        %v621 = vld [vmem:[%s620] sm:$0x1]
        %v623 = vperm.slane %v621, 0
        %v641 = vunpack.c.l.b16 %v604
        %v642 = vunpack.c.l.b16 %v605
        %v643 = vunpack.c.l.b16 %v606
        %v644 = vunpack.c.l.b16 %v607
        %v645 = vunpack.c.l.b16 %v608
        %v646 = vunpack.c.l.b16 %v609
        %v647 = vunpack.c.l.b16 %v610
        %v648 = vunpack.c.l.b16 %v611
        %v649 = vunpack.c.l.b16 %v612
        %v650 = vunpack.c.l.b16 %v613
        %v651 = vunpack.c.l.b16 %v614
        %v652 = vunpack.c.l.b16 %v615
        %v653 = vunpack.c.l.b16 %v616
        %v654 = vunpack.c.l.b16 %v617
        %v655 = vunpack.c.l.b16 %v618
        %v656 = vunpack.c.l.b16 %v619
        %v657 = vpack.c.b16 %v642, %v641
        %v658 = vpack.c.b16 %v644, %v643
        %v659 = vpack.c.b16 %v646, %v645
        %v660 = vpack.c.b16 %v648, %v647
        %v661 = vpack.c.b16 %v650, %v649
        %v662 = vpack.c.b16 %v652, %v651
        %v663 = vpack.c.b16 %v654, %v653
        %v664 = vpack.c.b16 %v656, %v655
        %673 = vmatpush.bf16.msra.mxu0 %v664
        %674 = vmatpush.bf16.msra.mxu0 %v663
        %675 = vmatpush.bf16.msra.mxu0 %v662
        %676 = vmatpush.bf16.msra.mxu0 %v661
        %677 = vmatpush.bf16.msra.mxu0 %v660
        %678 = vmatpush.bf16.msra.mxu0 %v659
        %679 = vmatpush.bf16.msra.mxu0 %v658
        %680 = vmatpush.bf16.msra.mxu0 %v657
        %681 = vmatmul.bf16.gmra.mxu0 %v587
        %v682 = vpop.f32.mrf.mxu0
        %v683 = vadd.f32 %v623, %v682
        %v684 = vpop.f32.mrf.mxu0
        %v685 = vadd.f32 %v623, %v684
        %686 = vmatmul.bf16.gmra.mxu0 %v588
        %v687 = vpop.f32.mrf.mxu0
        %v688 = vadd.f32 %v623, %v687
        %v689 = vpop.f32.mrf.mxu0
        %v690 = vadd.f32 %v623, %v689
        %691 = vmatmul.bf16.gmra.mxu0 %v589
        %v692 = vpop.f32.mrf.mxu0
        %v693 = vadd.f32 %v623, %v692
        %v694 = vpop.f32.mrf.mxu0
        %v695 = vadd.f32 %v623, %v694
        %696 = vmatmul.bf16.gmra.mxu0 %v590
        %v697 = vpop.f32.mrf.mxu0
        %v698 = vadd.f32 %v623, %v697
        %v699 = vpop.f32.mrf.mxu0
        %v700 = vadd.f32 %v623, %v699
        %701 = vmatmul.bf16.gmra.mxu0 %v591
        %v702 = vpop.f32.mrf.mxu0
        %v703 = vadd.f32 %v623, %v702
        %v704 = vpop.f32.mrf.mxu0
        %v705 = vadd.f32 %v623, %v704
        %706 = vmatmul.bf16.gmra.mxu0 %v592
        %v707 = vpop.f32.mrf.mxu0
        %v708 = vadd.f32 %v623, %v707
        %v709 = vpop.f32.mrf.mxu0
        %v710 = vadd.f32 %v623, %v709
        %711 = vmatmul.bf16.gmra.mxu0 %v593
        %v712 = vpop.f32.mrf.mxu0
        %v713 = vadd.f32 %v623, %v712
        %v714 = vpop.f32.mrf.mxu0
        %v715 = vadd.f32 %v623, %v714
        %716 = vmatmul.bf16.gmra.mxu0 %v594
        %v717 = vpop.f32.mrf.mxu0
        %v718 = vadd.f32 %v623, %v717
        %v719 = vpop.f32.mrf.mxu0
        %v720 = vadd.f32 %v623, %v719
        %721 = vmatmul.bf16.gmra.mxu0 %v595
        %v722 = vpop.f32.mrf.mxu0
        %v723 = vadd.f32 %v623, %v722
        %v724 = vpop.f32.mrf.mxu0
        %v725 = vadd.f32 %v623, %v724
        %726 = vmatmul.bf16.gmra.mxu0 %v596
        %v727 = vpop.f32.mrf.mxu0
        %v728 = vadd.f32 %v623, %v727
        %v729 = vpop.f32.mrf.mxu0
        %v730 = vadd.f32 %v623, %v729
        %731 = vmatmul.bf16.gmra.mxu0 %v597
        %v732 = vpop.f32.mrf.mxu0
        %v733 = vadd.f32 %v623, %v732
        %v734 = vpop.f32.mrf.mxu0
        %v735 = vadd.f32 %v623, %v734
        %736 = vmatmul.bf16.gmra.mxu0 %v598
        %v737 = vpop.f32.mrf.mxu0
        %v738 = vadd.f32 %v623, %v737
        %v739 = vpop.f32.mrf.mxu0
        %v740 = vadd.f32 %v623, %v739
        %741 = vmatmul.bf16.gmra.mxu0 %v599
        %v742 = vpop.f32.mrf.mxu0
        %v743 = vadd.f32 %v623, %v742
        %v744 = vpop.f32.mrf.mxu0
        %v745 = vadd.f32 %v623, %v744
        %746 = vmatmul.bf16.gmra.mxu0 %v600
        %v747 = vpop.f32.mrf.mxu0
        %v748 = vadd.f32 %v623, %v747
        %v749 = vpop.f32.mrf.mxu0
        %v750 = vadd.f32 %v623, %v749
        %751 = vmatmul.bf16.gmra.mxu0 %v601
        %v752 = vpop.f32.mrf.mxu0
        %v753 = vadd.f32 %v623, %v752
        %v754 = vpop.f32.mrf.mxu0
        %v755 = vadd.f32 %v623, %v754
        %756 = vmatmul.bf16.gmra.mxu0 %v602
        %v757 = vpop.f32.mrf.mxu0
        %v758 = vadd.f32 %v623, %v757
        %v759 = vpop.f32.mrf.mxu0
        %v760 = vadd.f32 %v623, %v759
        %761 = vdwg.mxu0
        %v762 = vtanh.pop %v683
        %v763 = vtanh.pop %v685
        %v764 = vtanh.pop %v688
        %v765 = vtanh.pop %v690
        %v766 = vtanh.pop %v693
        %v767 = vtanh.pop %v695
        %v768 = vtanh.pop %v698
        %v769 = vtanh.pop %v700
        %v770 = vtanh.pop %v703
        %v771 = vtanh.pop %v705
        %v772 = vtanh.pop %v708
        %v773 = vtanh.pop %v710
        %v774 = vtanh.pop %v713
        %v775 = vtanh.pop %v715
        %v776 = vtanh.pop %v718
        %v777 = vtanh.pop %v720
        %v778 = vtanh.pop %v723
        %v779 = vtanh.pop %v725
        %v780 = vtanh.pop %v728
        %v781 = vtanh.pop %v730
        %v782 = vtanh.pop %v733
        %v783 = vtanh.pop %v735
        %v784 = vtanh.pop %v738
        %v785 = vtanh.pop %v740
        %v786 = vtanh.pop %v743
        %v787 = vtanh.pop %v745
        %v788 = vtanh.pop %v748
        %v789 = vtanh.pop %v750
        %v790 = vtanh.pop %v753
        %v791 = vtanh.pop %v755
        %v792 = vtanh.pop %v758
        %v793 = vtanh.pop %v760
        %v794 = vpack.c.bf16 %v762, %v762
        %v795 = vpack.c.bf16 %v763, %v763
        %v796 = vpack.c.bf16 %v764, %v764
        %v797 = vpack.c.bf16 %v765, %v765
        %v798 = vpack.c.bf16 %v766, %v766
        %v799 = vpack.c.bf16 %v767, %v767
        %v800 = vpack.c.bf16 %v768, %v768
        %v801 = vpack.c.bf16 %v769, %v769
        %v802 = vpack.c.bf16 %v770, %v770
        %v803 = vpack.c.bf16 %v771, %v771
        %v804 = vpack.c.bf16 %v772, %v772
        %v805 = vpack.c.bf16 %v773, %v773
        %v806 = vpack.c.bf16 %v774, %v774
        %v807 = vpack.c.bf16 %v775, %v775
        %v808 = vpack.c.bf16 %v776, %v776
        %v809 = vpack.c.bf16 %v777, %v777
        %v810 = vpack.c.bf16 %v778, %v778
        %v811 = vpack.c.bf16 %v779, %v779
        %v812 = vpack.c.bf16 %v780, %v780
        %v813 = vpack.c.bf16 %v781, %v781
        %v814 = vpack.c.bf16 %v782, %v782
        %v815 = vpack.c.bf16 %v783, %v783
        %v816 = vpack.c.bf16 %v784, %v784
        %v817 = vpack.c.bf16 %v785, %v785
        %v818 = vpack.c.bf16 %v786, %v786
        %v819 = vpack.c.bf16 %v787, %v787
        %v820 = vpack.c.bf16 %v788, %v788
        %v821 = vpack.c.bf16 %v789, %v789
        %v822 = vpack.c.bf16 %v790, %v790
        %v823 = vpack.c.bf16 %v791, %v791
        %v824 = vpack.c.bf16 %v792, %v792
        %v825 = vpack.c.bf16 %v793, %v793
        %826 = vst [vmem:[%s267] sm:$0xf] %v794
        %827 = vst [vmem:[%s267 + $0x4] sm:$0xf] %v795
        %828 = vst [vmem:[%s267 + $0x8] sm:$0xf] %v796
        %829 = vst [vmem:[%s267 + $0xc] sm:$0xf] %v797
        %830 = vst [vmem:[%s267 + $0x10] sm:$0xf] %v798
        %831 = vst [vmem:[%s267 + $0x14] sm:$0xf] %v799
        %832 = vst [vmem:[%s267 + $0x18] sm:$0xf] %v800
        %833 = vst [vmem:[%s267 + $0x1c] sm:$0xf] %v801
        %834 = vst [vmem:[%s267 + $0x20] sm:$0xf] %v802
        %835 = vst [vmem:[%s267 + $0x24] sm:$0xf] %v803
        %836 = vst [vmem:[%s267 + $0x28] sm:$0xf] %v804
        %837 = vst [vmem:[%s267 + $0x2c] sm:$0xf] %v805
        %838 = vst [vmem:[%s267 + $0x30] sm:$0xf] %v806
        %839 = vst [vmem:[%s267 + $0x34] sm:$0xf] %v807
        %840 = vst [vmem:[%s267 + $0x38] sm:$0xf] %v808
        %841 = vst [vmem:[%s267 + $0x3c] sm:$0xf] %v809
        %842 = vst [vmem:[%s267 + $0x40] sm:$0xf] %v810
        %843 = vst [vmem:[%s267 + $0x44] sm:$0xf] %v811
        %844 = vst [vmem:[%s267 + $0x48] sm:$0xf] %v812
        %845 = vst [vmem:[%s267 + $0x4c] sm:$0xf] %v813
        %846 = vst [vmem:[%s267 + $0x50] sm:$0xf] %v814
        %847 = vst [vmem:[%s267 + $0x54] sm:$0xf] %v815
        %848 = vst [vmem:[%s267 + $0x58] sm:$0xf] %v816
        %849 = vst [vmem:[%s267 + $0x5c] sm:$0xf] %v817
        %850 = vst [vmem:[%s267 + $0x60] sm:$0xf] %v818
        %851 = vst [vmem:[%s267 + $0x64] sm:$0xf] %v819
        %852 = vst [vmem:[%s267 + $0x68] sm:$0xf] %v820
        %853 = vst [vmem:[%s267 + $0x6c] sm:$0xf] %v821
        %854 = vst [vmem:[%s267 + $0x70] sm:$0xf] %v822
        %855 = vst [vmem:[%s267 + $0x74] sm:$0xf] %v823
        %856 = vst [vmem:[%s267 + $0x78] sm:$0xf] %v824
        %857 = vst [vmem:[%s267 + $0x7c] sm:$0xf] %v825
        %s858 = sand.u32 %s121, 1
        %s859 = scalar_lea.sflag [#allocation4], %s858
        %s860 = sand.u32 %s121, 1
        %s861 = smul.addr %s860, 128
        %s862 = scalar_lea.vmem [#allocation8], %s861
        // Predicated region
        $region45: #{tpu_custom_call.1} parent=31 // pred_check
          %p863 = pneg %p131
        $region46: #{tpu_custom_call.1} parent=31 // pred_check_branch
          %865 = sbr.rel (%p863) target = $region48
        $region47: #{tpu_custom_call.1} parent=31 // pred_region
          %s866 = smul.u32 32, %s26
          %868 = vsyncadd %s859, 0
          %s869 = smul.addr %s866, 3
          %s870 = sadd.s32 %s25, %s869
          %s871 = smul.addr %s870, 4
          %s872 = scalar_lea.hbm %s3, %s871
          %s873 = sshll.u32 %s862, 4
          %s874 = int_to_ptr.vmem [resolvable:$true] %s873
          %s875 = sshll.u32 %s872, 4
          %s876 = int_to_ptr.hbm [resolvable:$true] %s875
          %881 = dma.vmem_to_hbm [thread:$0]  %s874, 2048, %s876, %s859, 64, 192, 4
        $region48: #{tpu_custom_call.1} parent=31 // pred_fallthru
          _
      $region32: #{tpu_custom_call.1} parent=5 // pred_fallthru
        _
      %p882 = scmp.le.s32.totalorder 2, %s16
      // Predicated region
      $region49: #{tpu_custom_call.1} parent=5 // pred_check
        %p883 = pneg %p882
      $region50: #{tpu_custom_call.1} parent=5 // pred_check_branch
        %885 = sbr.rel (%p883) target = $region52
      $region51: #{tpu_custom_call.1} parent=5 // pred_region
        %s886 = ssub.s32 %s16, 2
        // Predicated region
        $region53: #{tpu_custom_call.1} parent=51 // pred_check
          %p887 = pneg %p137
        $region54: #{tpu_custom_call.1} parent=51 // pred_check_branch
          %889 = sbr.rel (%p887) target = $region56
        $region55: #{tpu_custom_call.1} parent=51 // pred_region
          %s890 = sand.u32 %s122, 1
          %s891 = scalar_lea.sflag [#allocation4], %s890
          %s892 = sand.u32 %s122, 1
          %s893 = smul.addr %s892, 128
          %s894 = scalar_lea.vmem [#allocation8], %s893
          %896 = dma.done %s891, 2048
        $region56: #{tpu_custom_call.1} parent=51 // pred_fallthru
          _
      $region52: #{tpu_custom_call.1} parent=5 // pred_fallthru
        _
    $region6: #{tpu_custom_call.1} parent=1 // loop_footer
      %s20 = sadd.s32 1, %s16
    $region7: #{tpu_custom_call.1} parent=1 // loop_footer_branch
      %15 = sbr.rel target = $region3
    $region8: #{tpu_custom_call.1} parent=1 // loop_exit
      _
    %897 = vsyncpa [#allocation3], 1
    %s898 = scalar_lea.sflag [#allocation3], 1
    %899 = vsyncpa %s898, 1
    %900 = vsyncpa [#allocation6], 1
    %s901 = scalar_lea.sflag [#allocation6], 1
    %902 = vsyncpa %s901, 1
    %903 = vsyncpa [#allocation4], 1
    %s904 = scalar_lea.sflag [#allocation4], 1
    %905 = vsyncpa %s904, 1

</llo_original>
